<compile_context>
chip_gen: v7x
topology: tpu7x:2x2x1
jax: 0.10.0
libtpu: 0.0.40
codegen_flags: <defaults>
</compile_context>

<pallas_src>
import functools

import jax
import jax.numpy as jnp
from jax.experimental import pallas as pl
from jax.experimental.pallas import tpu as pltpu


def _voting_kernel(feat_ref, seed_ref, w1_ref, b1_ref, w2_ref, b2_ref,
                   w3_ref, b3_ref, xyz_ref, featout_ref, *, factor_v, dim_out):
    """Per (batch, N-tile) body, channel-first.

    feat_ref: (C, T) f32/bf16        seed_ref: (3, T) f32
    w1/w2:    (C, C) bf16            b1/b2:    (C, 1) f32   (BN folded in)
    w3:       (fv*(C+8), C) bf16   rows = [feat rows per factor ..., 8-padded xyz rows per factor]
    b3:       (fv*(C+8), 1) f32
    xyz_ref:      (fv, 3, T) f32
    featout_ref:  (fv, C, T) bf16 (or f32)
    """
    f = feat_ref[...]
    f_bf = f.astype(jnp.bfloat16)       # MXU operand
    f_res = f.astype(jnp.float32)       # residual add in f32

    # relu(bn1(c1(x))), relu(bn2(c2(x))) -- 1x1 conv == matmul, BN folded in.
    h = jnp.dot(w1_ref[...], f_bf, preferred_element_type=jnp.float32) + b1_ref[...]
    h = jnp.maximum(h, 0.0)
    h = jnp.dot(w2_ref[...], h.astype(jnp.bfloat16),
                preferred_element_type=jnp.float32) + b2_ref[...]
    h = jnp.maximum(h, 0.0)

    # c3: single fused wide matmul for all vote factors (feature + xyz offsets).
    net = jnp.dot(w3_ref[...], h.astype(jnp.bfloat16),
                  preferred_element_type=jnp.float32) + b3_ref[...]   # (fv*(C+8), T)

    seed = seed_ref[...].astype(jnp.float32)                          # (3, T)
    nf = factor_v * dim_out
    # Tiny static unroll over vote factors for the residual adds only (the
    # matmul above is already fused).  All stores are lane-dense in T, and the
    # xyz slices start on 8-aligned sublane offsets (padded w3 rows).
    for v in range(factor_v):
        f_off = net[v * dim_out:(v + 1) * dim_out, :]
        featout_ref[v, :, :] = (f_res + f_off).astype(featout_ref.dtype)
        x_off = net[nf + v * 8: nf + v * 8 + 3, :]
        xyz_ref[v, :, :] = (seed + x_off).astype(xyz_ref.dtype)


def _pick_tile_n(n_pad, batch, c, factor_v, in_bytes, out_bytes,
                 vmem_budget=24 * 1024 * 1024):
    """Largest lane-dense tile that (a) fits a conservative VMEM estimate (safe
    for v7x's 32 MiB scoped default) and (b) keeps >= 4 grid steps when
    possible (>= 2 pipelined steps per TensorCore on v7x megacore)."""
    rows3 = factor_v * (c + 8)

    def vmem_est(t):
        feat_in = 2 * c * t * in_bytes                              # dbl-buffered input tile
        outs = 2 * factor_v * t * (c * out_bytes + 8 * 4)           # dbl-buffered outputs
        weights = 2 * ((2 * c * c + rows3 * c) * 2                  # bf16 weights
                       + (2 * c + rows3) * 128 * 4)                 # lane-padded f32 biases
        inter = (2 * c * t + rows3 * t) * 4 + c * t * 2             # h, net, bf16 casts
        return feat_in + outs + weights + inter

    cands = [t for t in (1024, 512, 256, 128)
             if n_pad % t == 0 and vmem_est(t) <= vmem_budget]
    if not cands:
        return 128 if n_pad % 128 == 0 else n_pad
    for t in cands:                      # largest tile with >= 4 grid steps
        if batch * (n_pad // t) >= 4:
            return t
    return cands[0]                      # tiny problems: just take the largest tile


def voting_module_forward(s_tens, feat_s, params, factor_v, *,
                          features_dtype=jnp.bfloat16, return_grouped=False):
    """s_tens: (B, N, 3) seed xyz;  feat_s: (B, C, N) seed features (PyTorch NCL).

    Default (return_grouped=False) matches the PyTorch module exactly:
      vote_xyz      (B, N*factor_v, 3)   float32
      vote_features (B, C, N*factor_v)   features_dtype (bf16 by default)
    return_grouped=True skips the per-seed interleave (and its HBM round trip)
    and returns the kernel-native grouped layouts (B, fv, 3, N) / (B, fv, C, N)
    — valid only for vote-order-invariant consumers.
    """
    B, N, _ = s_tens.shape
    C = feat_s.shape[1]
    dim_out = C
    dim_o = 3 + dim_out
    num_vote = N * factor_v
    eps = 1e-5

    # ---- glue: BN folding (eval mode) ---------------------------------------
    def fold_bn(w, b, bn):
        gamma, beta, mean, var = bn
        scale = gamma / jnp.sqrt(var + eps)                 # per out-channel
        return w * scale[:, None], (b - mean) * scale + beta

    w1, b1 = fold_bn(params["w1"], params["b1"], params["bn1"])
    w2, b2 = fold_bn(params["w2"], params["b2"], params["bn2"])

    # c3 rows (factor_v*dim_o, C): per factor [0:3]=xyz, [3:]=feat.  Re-order to
    # [all feature rows (tile-aligned slab)] + [xyz rows zero-padded to 8 rows
    # per factor] so every in-kernel slice starts on an 8-aligned sublane.
    w3r = params["w3"].reshape(factor_v, dim_o, C)
    b3r = params["b3"].reshape(factor_v, dim_o)
    w3_feat = w3r[:, 3:, :].reshape(factor_v * dim_out, C)
    b3_feat = b3r[:, 3:].reshape(factor_v * dim_out)
    w3_xyz = jnp.pad(w3r[:, :3, :], ((0, 0), (0, 5), (0, 0))).reshape(factor_v * 8, C)
    b3_xyz = jnp.pad(b3r[:, :3], ((0, 0), (0, 5))).reshape(factor_v * 8)
    w3_all = jnp.concatenate([w3_feat, w3_xyz], axis=0)      # (fv*(C+8), C)
    b3_all = jnp.concatenate([b3_feat, b3_xyz], axis=0)
    rows3 = factor_v * (dim_out + 8)

    w1b = w1.astype(jnp.bfloat16)
    w2b = w2.astype(jnp.bfloat16)
    w3b = w3_all.astype(jnp.bfloat16)
    b1c = b1[:, None].astype(jnp.float32)                    # (C, 1)
    b2c = b2[:, None].astype(jnp.float32)
    b3c = b3_all[:, None].astype(jnp.float32)                # (fv*(C+8), 1)

    seed_cf = jnp.transpose(s_tens, (0, 2, 1)).astype(jnp.float32)   # (B, 3, N), tiny

    # Pad N to a multiple of 128 so all kernel stores stay lane-dense.
    n_pad = ((N + 127) // 128) * 128
    feat_in = feat_s
    if n_pad != N:
        feat_in = jnp.pad(feat_in, ((0, 0), (0, 0), (0, n_pad - N)))
        seed_cf = jnp.pad(seed_cf, ((0, 0), (0, 0), (0, n_pad - N)))

    in_bytes = jnp.dtype(feat_in.dtype).itemsize
    out_bytes = jnp.dtype(features_dtype).itemsize
    tile_n = _pick_tile_n(n_pad, B, C, factor_v, in_bytes, out_bytes)
    grid = (B, n_pad // tile_n)

    kernel = functools.partial(_voting_kernel, factor_v=factor_v, dim_out=dim_out)

    def wspec(shape):
        # Grid-invariant weight/bias blocks: the constant index_map means the
        # pipeline fetches them only once.  Default buffering kept (VMEM is not
        # the binding constraint at these tile sizes).
        return pl.BlockSpec(shape, lambda b, n: (0,) * len(shape))

    out_xyz, out_feat = pl.pallas_call(
        kernel,
        out_shape=(
            jax.ShapeDtypeStruct((B, factor_v, 3, n_pad), jnp.float32),
            jax.ShapeDtypeStruct((B, factor_v, dim_out, n_pad), features_dtype),
        ),
        grid=grid,
        in_specs=[
            pl.BlockSpec((None, C, tile_n), lambda b, n: (b, 0, n)),   # feat (B,C,Np)
            pl.BlockSpec((None, 3, tile_n), lambda b, n: (b, 0, n)),   # seed (B,3,Np)
            wspec((C, C)), wspec((C, 1)),                              # w1, b1
            wspec((C, C)), wspec((C, 1)),                              # w2, b2
            wspec((rows3, C)), wspec((rows3, 1)),                      # w3, b3 (fused)
        ],
        out_specs=(
            pl.BlockSpec((None, factor_v, 3, tile_n), lambda b, n: (b, 0, 0, n)),
            pl.BlockSpec((None, factor_v, dim_out, tile_n), lambda b, n: (b, 0, 0, n)),
        ),
        compiler_params=pltpu.CompilerParams(
            dimension_semantics=("parallel", "parallel")),
    )(feat_in, seed_cf, w1b, b1c, w2b, b2c, w3b, b3c)

    if n_pad != N:
        out_xyz = out_xyz[..., :N]
        out_feat = out_feat[..., :N]

    if return_grouped:
        # Vote-order-invariant fast path: no extra HBM round trip.
        return out_xyz, out_feat

    # ---- glue: PyTorch per-seed interleaved vote order ----------------------
    # Full HBM round trip of the feature output, now on bf16 data (half the
    # previous traffic).  xyz is tiny (3 channels), negligible.
    vote_xyz = jnp.transpose(out_xyz, (0, 3, 1, 2)).reshape(B, num_vote, 3)
    vote_features = jnp.transpose(out_feat, (0, 2, 3, 1)).reshape(B, dim_out, num_vote)
    return vote_xyz, vote_features


# ----------------------------- references -----------------------------------
def reference_forward(s_tens, feat_s, params, factor_v):
    """Pure-JAX f32 reference mirroring the PyTorch forward (eval-mode BN)."""
    B, N, _ = s_tens.shape
    C = feat_s.shape[1]
    dim_out = C
    dim_o = 3 + dim_out
    eps = 1e-5

    def conv_bn_relu(x, w, b, bn):
        gamma, beta, mean, var = bn
        y = jnp.einsum("oc,bcn->bon", w, x) + b[None, :, None]
        y = (y - mean[None, :, None]) / jnp.sqrt(var + eps)[None, :, None]
        y = gamma[None, :, None] * y + beta[None, :, None]
        return jnp.maximum(y, 0.0)

    net = conv_bn_relu(feat_s, params["w1"], params["b1"], params["bn1"])
    net = conv_bn_relu(net, params["w2"], params["b2"], params["bn2"])
    net = jnp.einsum("oc,bcn->bon", params["w3"], net) + params["b3"][None, :, None]
    net = jnp.transpose(net, (0, 2, 1)).reshape(B, N, factor_v, dim_o)

    vote_xyz = (s_tens[:, :, None, :] + net[..., :3]).reshape(B, N * factor_v, 3)
    f_t = jnp.transpose(feat_s, (0, 2, 1))
    vote_features = (f_t[:, :, None, :] + net[..., 3:]).reshape(B, N * factor_v, dim_out)
    return vote_xyz, jnp.transpose(vote_features, (0, 2, 1))


def matched_reference(s_tens, feat_s, params, factor_v):
    """Reference using the kernel's recipe (folded BN, bf16 matmuls, f32 accum,
    bf16-rounded feature output)."""
    B, N, _ = s_tens.shape
    C = feat_s.shape[1]
    dim_out = C
    dim_o = 3 + dim_out
    eps = 1e-5

    def fold_bn(w, b, bn):
        gamma, beta, mean, var = bn
        scale = gamma / jnp.sqrt(var + eps)
        return w * scale[:, None], (b - mean) * scale + beta

    def mm(w, x):
        return jnp.einsum("oc,bcn->bon", w.astype(jnp.bfloat16),
                          x.astype(jnp.bfloat16),
                          preferred_element_type=jnp.float32)

    w1, b1 = fold_bn(params["w1"], params["b1"], params["bn1"])
    w2, b2 = fold_bn(params["w2"], params["b2"], params["bn2"])
    h = jnp.maximum(mm(w1, feat_s.astype(jnp.float32)) + b1[None, :, None], 0.0)
    h = jnp.maximum(mm(w2, h) + b2[None, :, None], 0.0)
    net = mm(params["w3"], h) + params["b3"][None, :, None]
    net = jnp.transpose(net, (0, 2, 1)).reshape(B, N, factor_v, dim_o)

    vote_xyz = (s_tens[:, :, None, :] + net[..., :3]).reshape(B, N * factor_v, 3)
    f_t = jnp.transpose(feat_s.astype(jnp.float32), (0, 2, 1))
    vote_features = (f_t[:, :, None, :] + net[..., 3:]).reshape(B, N * factor_v, dim_out)
    vote_features = jnp.transpose(vote_features, (0, 2, 1))
    vote_features = vote_features.astype(jnp.bfloat16).astype(jnp.float32)
    return vote_xyz, vote_features


# --------------------------------- tests -------------------------------------
def _make_params(key, C, factor_v):
    dim_of = (3 + C) * factor_v
    ks = jax.random.split(key, 14)
    return {
        "w1": 0.1 * jax.random.normal(ks[0], (C, C), jnp.float32),
        "b1": 0.1 * jax.random.normal(ks[1], (C,), jnp.float32),
        "w2": 0.1 * jax.random.normal(ks[2], (C, C), jnp.float32),
        "b2": 0.1 * jax.random.normal(ks[3], (C,), jnp.float32),
        "w3": 0.1 * jax.random.normal(ks[4], (dim_of, C), jnp.float32),
        "b3": 0.1 * jax.random.normal(ks[5], (dim_of,), jnp.float32),
        # BatchNorm params: (gamma, beta, running_mean, running_var)
        "bn1": (1.0 + 0.1 * jax.random.normal(ks[6], (C,), jnp.float32),
                0.1 * jax.random.normal(ks[7], (C,), jnp.float32),
                0.1 * jax.random.normal(ks[8], (C,), jnp.float32),
                0.5 + jax.nn.softplus(jax.random.normal(ks[9], (C,), jnp.float32))),
        "bn2": (1.0 + 0.1 * jax.random.normal(ks[10], (C,), jnp.float32),
                0.1 * jax.random.normal(ks[11], (C,), jnp.float32),
                0.1 * jax.random.normal(ks[12], (C,), jnp.float32),
                0.5 + jax.nn.softplus(jax.random.normal(ks[13], (C,), jnp.float32))),
    }


if __name__ == "__main__":
    # ---- Test 1: small shapes (B=2, C=32, N=16, factor_v=2) ------------------
    B, C, N, factor_v = 2, 32, 16, 2
    key = jax.random.PRNGKey(0)
    kp, kd = jax.random.split(key)
    params = _make_params(kp, C, factor_v)
    kd1, kd2 = jax.random.split(kd)
    s_tens = jax.random.normal(kd1, (B, N, 3), jnp.float32)       # seed xyz
    feat_s = jax.random.normal(kd2, (B, C, N), jnp.float32)       # seed features (NCL)

    vote_xyz, vote_features = voting_module_forward(s_tens, feat_s, params, factor_v)
    jax.block_until_ready((vote_xyz, vote_features))
    assert vote_xyz.shape == (B, N * factor_v, 3) and vote_xyz.dtype == jnp.float32
    assert vote_features.shape == (B, C, N * factor_v)
    assert vote_features.dtype == jnp.bfloat16

    m_xyz, m_feat = matched_reference(s_tens, feat_s, params, factor_v)
    assert jnp.allclose(vote_xyz, m_xyz, atol=5e-3, rtol=5e-3)
    assert jnp.allclose(vote_features.astype(jnp.float32), m_feat, atol=5e-2, rtol=2e-2)

    ref_xyz, ref_feat = reference_forward(s_tens, feat_s, params, factor_v)
    assert jnp.allclose(vote_xyz, ref_xyz, atol=5e-2, rtol=5e-2)
    assert jnp.allclose(vote_features.astype(jnp.float32), ref_feat, atol=1e-1, rtol=5e-2)

    # Grouped (vote-order-invariant) fast path: same values, grouped layout.
    g_xyz, g_feat = voting_module_forward(s_tens, feat_s, params, factor_v,
                                          return_grouped=True)
    jax.block_until_ready((g_xyz, g_feat))
    gm_xyz = jnp.transpose(m_xyz.reshape(B, N, factor_v, 3), (0, 2, 3, 1))
    gm_feat = jnp.transpose(m_feat.reshape(B, C, N, factor_v), (0, 3, 1, 2))
    assert g_xyz.shape == (B, factor_v, 3, N)
    assert g_feat.shape == (B, factor_v, C, N)
    assert jnp.allclose(g_xyz, gm_xyz, atol=5e-3, rtol=5e-3)
    assert jnp.allclose(g_feat.astype(jnp.float32), gm_feat, atol=5e-2, rtol=2e-2)

    # ---- Test 2: N not a multiple of 128, multi-tile grid, factor_v=3 --------
    B2, C2, N2, fv2 = 2, 64, 200, 3
    params2 = _make_params(jax.random.PRNGKey(1), C2, fv2)
    k2a, k2b = jax.random.split(jax.random.PRNGKey(2))
    s2 = jax.random.normal(k2a, (B2, N2, 3), jnp.float32)
    f2 = jax.random.normal(k2b, (B2, C2, N2), jnp.float32)

    v_xyz2, v_feat2 = voting_module_forward(s2, f2, params2, fv2)
    jax.block_until_ready((v_xyz2, v_feat2))
    assert v_xyz2.shape == (B2, N2 * fv2, 3)
    assert v_feat2.shape == (B2, C2, N2 * fv2)

    m_xyz2, m_feat2 = matched_reference(s2, f2, params2, fv2)
    assert jnp.allclose(v_xyz2, m_xyz2, atol=5e-3, rtol=5e-3)
    assert jnp.allclose(v_feat2.astype(jnp.float32), m_feat2, atol=5e-2, rtol=2e-2)

    print("KERNEL_OK")
</pallas_src>

<mosaic_0001>
module attributes {stable_mosaic.version = 11 : i64} {
  func.func @_voting_kernel(%arg0: i32, %arg1: i32, %arg2: memref<1x32x128xf32, #tpu.memory_space<vmem>>, %arg3: memref<1x3x128xf32, #tpu.memory_space<vmem>>, %arg4: memref<32x32xbf16, #tpu.memory_space<vmem>>, %arg5: memref<32x1xf32, #tpu.memory_space<vmem>>, %arg6: memref<32x32xbf16, #tpu.memory_space<vmem>>, %arg7: memref<32x1xf32, #tpu.memory_space<vmem>>, %arg8: memref<80x32xbf16, #tpu.memory_space<vmem>>, %arg9: memref<80x1xf32, #tpu.memory_space<vmem>>, %arg10: memref<1x2x3x128xf32, #tpu.memory_space<vmem>>, %arg11: memref<1x2x32x128xbf16, #tpu.memory_space<vmem>>) attributes {dimension_semantics = [#tpu.dimension_semantics<parallel>, #tpu.dimension_semantics<parallel>], iteration_bounds = array<i64: 2, 1>, scalar_prefetch = 0 : i64, scratch_operands = 0 : i64, tpu.core_type = #tpu.core_type<tc>, window_params = [{transform_indices = @transform_0, window_bounds = array<i64: 1, 32, 128>}, {transform_indices = @transform_1, window_bounds = array<i64: 1, 3, 128>}, {pipeline_mode = #tpu.pipeline_mode<synchronous>, transform_indices = @transform_2, window_bounds = array<i64: 32, 32>}, {pipeline_mode = #tpu.pipeline_mode<synchronous>, transform_indices = @transform_3, window_bounds = array<i64: 32, 1>}, {pipeline_mode = #tpu.pipeline_mode<synchronous>, transform_indices = @transform_4, window_bounds = array<i64: 32, 32>}, {pipeline_mode = #tpu.pipeline_mode<synchronous>, transform_indices = @transform_5, window_bounds = array<i64: 32, 1>}, {pipeline_mode = #tpu.pipeline_mode<synchronous>, transform_indices = @transform_6, window_bounds = array<i64: 80, 32>}, {pipeline_mode = #tpu.pipeline_mode<synchronous>, transform_indices = @transform_7, window_bounds = array<i64: 80, 1>}, {transform_indices = @transform_8, window_bounds = array<i64: 1, 2, 3, 128>}, {transform_indices = @transform_9, window_bounds = array<i64: 1, 2, 32, 128>}]} {
    %c0 = arith.constant 0 : index
    %c0_0 = arith.constant 0 : index
    %c0_1 = arith.constant 0 : index
    %0 = vector.load %arg2[%c0, %c0_0, %c0_1] : memref<1x32x128xf32, #tpu.memory_space<vmem>>, vector<1x32x128xf32>
    %1 = vector.shape_cast %0 : vector<1x32x128xf32> to vector<32x128xf32>
    %2 = arith.truncf %1 : vector<32x128xf32> to vector<32x128xbf16>
    %c0_2 = arith.constant 0 : index
    %c0_3 = arith.constant 0 : index
    %3 = vector.load %arg4[%c0_2, %c0_3] : memref<32x32xbf16, #tpu.memory_space<vmem>>, vector<32x32xbf16>
    %cst = arith.constant dense<0.000000e+00> : vector<32x128xf32>
    %4 = tpu.matmul %3, %2, %cst {dimension_numbers = #tpu.dot_dimension_numbers<[1], [0], [0], [1], [0, 0, 1, 1], [], []>} : vector<32x32xbf16>, vector<32x128xbf16>, vector<32x128xf32> -> vector<32x128xf32>
    %c0_4 = arith.constant 0 : index
    %c0_5 = arith.constant 0 : index
    %5 = vector.load %arg5[%c0_4, %c0_5] : memref<32x1xf32, #tpu.memory_space<vmem>>, vector<32x1xf32>
    %6 = vector.broadcast %5 : vector<32x1xf32> to vector<32x128xf32>
    %7 = arith.addf %4, %6 : vector<32x128xf32>
    %cst_6 = arith.constant 0.000000e+00 : f32
    %8 = vector.broadcast %cst_6 : f32 to vector<32x128xf32>
    %9 = arith.maximumf %7, %8 : vector<32x128xf32>
    %c0_7 = arith.constant 0 : index
    %c0_8 = arith.constant 0 : index
    %10 = vector.load %arg6[%c0_7, %c0_8] : memref<32x32xbf16, #tpu.memory_space<vmem>>, vector<32x32xbf16>
    %11 = arith.truncf %9 : vector<32x128xf32> to vector<32x128xbf16>
    %cst_9 = arith.constant dense<0.000000e+00> : vector<32x128xf32>
    %12 = tpu.matmul %10, %11, %cst_9 {dimension_numbers = #tpu.dot_dimension_numbers<[1], [0], [0], [1], [0, 0, 1, 1], [], []>} : vector<32x32xbf16>, vector<32x128xbf16>, vector<32x128xf32> -> vector<32x128xf32>
    %c0_10 = arith.constant 0 : index
    %c0_11 = arith.constant 0 : index
    %13 = vector.load %arg7[%c0_10, %c0_11] : memref<32x1xf32, #tpu.memory_space<vmem>>, vector<32x1xf32>
    %14 = vector.broadcast %13 : vector<32x1xf32> to vector<32x128xf32>
    %15 = arith.addf %12, %14 : vector<32x128xf32>
    %cst_12 = arith.constant 0.000000e+00 : f32
    %16 = vector.broadcast %cst_12 : f32 to vector<32x128xf32>
    %17 = arith.maximumf %15, %16 : vector<32x128xf32>
    %c0_13 = arith.constant 0 : index
    %c0_14 = arith.constant 0 : index
    %18 = vector.load %arg8[%c0_13, %c0_14] : memref<80x32xbf16, #tpu.memory_space<vmem>>, vector<80x32xbf16>
    %19 = arith.truncf %17 : vector<32x128xf32> to vector<32x128xbf16>
    %cst_15 = arith.constant dense<0.000000e+00> : vector<80x128xf32>
    %20 = tpu.matmul %18, %19, %cst_15 {dimension_numbers = #tpu.dot_dimension_numbers<[1], [0], [0], [1], [0, 0, 1, 1], [], []>} : vector<80x32xbf16>, vector<32x128xbf16>, vector<80x128xf32> -> vector<80x128xf32>
    %c0_16 = arith.constant 0 : index
    %c0_17 = arith.constant 0 : index
    %21 = vector.load %arg9[%c0_16, %c0_17] : memref<80x1xf32, #tpu.memory_space<vmem>>, vector<80x1xf32>
    %22 = vector.broadcast %21 : vector<80x1xf32> to vector<80x128xf32>
    %23 = arith.addf %20, %22 : vector<80x128xf32>
    %c0_18 = arith.constant 0 : index
    %c0_19 = arith.constant 0 : index
    %c0_20 = arith.constant 0 : index
    %24 = vector.load %arg3[%c0_18, %c0_19, %c0_20] : memref<1x3x128xf32, #tpu.memory_space<vmem>>, vector<1x3x128xf32>
    %25 = vector.shape_cast %24 : vector<1x3x128xf32> to vector<3x128xf32>
    %26 = vector.extract_strided_slice %23 {offsets = [0, 0], sizes = [32, 128], strides = [1, 1]} : vector<80x128xf32> to vector<32x128xf32>
    %27 = arith.addf %1, %26 : vector<32x128xf32>
    %28 = arith.truncf %27 : vector<32x128xf32> to vector<32x128xbf16>
    %c0_21 = arith.constant 0 : index
    %c0_22 = arith.constant 0 : index
    %c0_23 = arith.constant 0 : index
    %c0_24 = arith.constant 0 : index
    %29 = vector.load %arg11[%c0_21, %c0_22, %c0_23, %c0_24] : memref<1x2x32x128xbf16, #tpu.memory_space<vmem>>, vector<1x1x32x128xbf16>
    %30 = vector.shape_cast %29 : vector<1x1x32x128xbf16> to vector<32x128xbf16>
    %31 = vector.shape_cast %28 : vector<32x128xbf16> to vector<1x1x32x128xbf16>
    tpu.vector_store %arg11[%c0_21, %c0_22, %c0_23, %c0_24], %31 {strides = array<i32>} : memref<1x2x32x128xbf16, #tpu.memory_space<vmem>>, vector<1x1x32x128xbf16>,
    %32 = vector.extract_strided_slice %23 {offsets = [64, 0], sizes = [3, 128], strides = [1, 1]} : vector<80x128xf32> to vector<3x128xf32>
    %33 = arith.addf %25, %32 : vector<3x128xf32>
    %c0_25 = arith.constant 0 : index
    %c0_26 = arith.constant 0 : index
    %c0_27 = arith.constant 0 : index
    %c0_28 = arith.constant 0 : index
    %34 = vector.load %arg10[%c0_25, %c0_26, %c0_27, %c0_28] : memref<1x2x3x128xf32, #tpu.memory_space<vmem>>, vector<1x1x3x128xf32>
    %35 = vector.shape_cast %34 : vector<1x1x3x128xf32> to vector<3x128xf32>
    %36 = vector.shape_cast %33 : vector<3x128xf32> to vector<1x1x3x128xf32>
    tpu.vector_store %arg10[%c0_25, %c0_26, %c0_27, %c0_28], %36 {strides = array<i32>} : memref<1x2x3x128xf32, #tpu.memory_space<vmem>>, vector<1x1x3x128xf32>,
    %37 = vector.extract_strided_slice %23 {offsets = [32, 0], sizes = [32, 128], strides = [1, 1]} : vector<80x128xf32> to vector<32x128xf32>
    %38 = arith.addf %1, %37 : vector<32x128xf32>
    %39 = arith.truncf %38 : vector<32x128xf32> to vector<32x128xbf16>
    %c0_29 = arith.constant 0 : index
    %c1 = arith.constant 1 : index
    %c0_30 = arith.constant 0 : index
    %c0_31 = arith.constant 0 : index
    %40 = vector.load %arg11[%c0_29, %c1, %c0_30, %c0_31] : memref<1x2x32x128xbf16, #tpu.memory_space<vmem>>, vector<1x1x32x128xbf16>
    %41 = vector.shape_cast %40 : vector<1x1x32x128xbf16> to vector<32x128xbf16>
    %42 = vector.shape_cast %39 : vector<32x128xbf16> to vector<1x1x32x128xbf16>
    tpu.vector_store %arg11[%c0_29, %c1, %c0_30, %c0_31], %42 {strides = array<i32>} : memref<1x2x32x128xbf16, #tpu.memory_space<vmem>>, vector<1x1x32x128xbf16>,
    %43 = vector.extract_strided_slice %23 {offsets = [72, 0], sizes = [3, 128], strides = [1, 1]} : vector<80x128xf32> to vector<3x128xf32>
    %44 = arith.addf %25, %43 : vector<3x128xf32>
    %c0_32 = arith.constant 0 : index
    %c1_33 = arith.constant 1 : index
    %c0_34 = arith.constant 0 : index
    %c0_35 = arith.constant 0 : index
    %45 = vector.load %arg10[%c0_32, %c1_33, %c0_34, %c0_35] : memref<1x2x3x128xf32, #tpu.memory_space<vmem>>, vector<1x1x3x128xf32>
    %46 = vector.shape_cast %45 : vector<1x1x3x128xf32> to vector<3x128xf32>
    %47 = vector.shape_cast %44 : vector<3x128xf32> to vector<1x1x3x128xf32>
    tpu.vector_store %arg10[%c0_32, %c1_33, %c0_34, %c0_35], %47 {strides = array<i32>} : memref<1x2x3x128xf32, #tpu.memory_space<vmem>>, vector<1x1x3x128xf32>,
    return
  }
  func.func @transform_0(%arg0: i32, %arg1: i32) -> (i32, i32, i32) {
    %c0_i32 = arith.constant 0 : i32
    %c0_i32_0 = arith.constant 0 : i32
    return %arg0, %c0_i32, %arg1 : i32, i32, i32
  }
  func.func @transform_1(%arg0: i32, %arg1: i32) -> (i32, i32, i32) {
    %c0_i32 = arith.constant 0 : i32
    %c0_i32_0 = arith.constant 0 : i32
    return %arg0, %c0_i32, %arg1 : i32, i32, i32
  }
  func.func @transform_2(%arg0: i32, %arg1: i32) -> (i32, i32) {
    %c0_i32 = arith.constant 0 : i32
    %c0_i32_0 = arith.constant 0 : i32
    %c0_i32_1 = arith.constant 0 : i32
    return %c0_i32, %c0_i32_0 : i32, i32
  }
  func.func @transform_3(%arg0: i32, %arg1: i32) -> (i32, i32) {
    %c0_i32 = arith.constant 0 : i32
    %c0_i32_0 = arith.constant 0 : i32
    %c0_i32_1 = arith.constant 0 : i32
    return %c0_i32, %c0_i32_0 : i32, i32
  }
  func.func @transform_4(%arg0: i32, %arg1: i32) -> (i32, i32) {
    %c0_i32 = arith.constant 0 : i32
    %c0_i32_0 = arith.constant 0 : i32
    %c0_i32_1 = arith.constant 0 : i32
    return %c0_i32, %c0_i32_0 : i32, i32
  }
  func.func @transform_5(%arg0: i32, %arg1: i32) -> (i32, i32) {
    %c0_i32 = arith.constant 0 : i32
    %c0_i32_0 = arith.constant 0 : i32
    %c0_i32_1 = arith.constant 0 : i32
    return %c0_i32, %c0_i32_0 : i32, i32
  }
  func.func @transform_6(%arg0: i32, %arg1: i32) -> (i32, i32) {
    %c0_i32 = arith.constant 0 : i32
    %c0_i32_0 = arith.constant 0 : i32
    %c0_i32_1 = arith.constant 0 : i32
    return %c0_i32, %c0_i32_0 : i32, i32
  }
  func.func @transform_7(%arg0: i32, %arg1: i32) -> (i32, i32) {
    %c0_i32 = arith.constant 0 : i32
    %c0_i32_0 = arith.constant 0 : i32
    %c0_i32_1 = arith.constant 0 : i32
    return %c0_i32, %c0_i32_0 : i32, i32
  }
  func.func @transform_8(%arg0: i32, %arg1: i32) -> (i32, i32, i32, i32) {
    %c0_i32 = arith.constant 0 : i32
    %c0_i32_0 = arith.constant 0 : i32
    %c0_i32_1 = arith.constant 0 : i32
    return %arg0, %c0_i32, %c0_i32_0, %arg1 : i32, i32, i32, i32
  }
  func.func @transform_9(%arg0: i32, %arg1: i32) -> (i32, i32, i32, i32) {
    %c0_i32 = arith.constant 0 : i32
    %c0_i32_0 = arith.constant 0 : i32
    %c0_i32_1 = arith.constant 0 : i32
    return %arg0, %c0_i32, %c0_i32_0, %arg1 : i32, i32, i32, i32
  }
}

</mosaic_0001>

<llo_original>
// kernel: tpu_custom_call.1
$region0: #{tpu_custom_call.1}
  #allocation0 [shape = 'u32[]', space=smem, size = 0x4, offset = 0x4, fixed_abs, tag = 'smem constant byte address 0x4 - core index']
  #allocation1 [shape = 'u32[144,128]{1,0:T(1,128)}', space=vmem, size = 0x12000, scoped, tag = 'internal scratch']
  %s0 = inlined_call_operand.vmem [shape: f32[2,32,128], index: 0, kind: input, shape index: {}]
  %s1 = inlined_call_operand.vmem [shape: f32[2,3,128], index: 1, kind: input, shape index: {}]
  %s2 = inlined_call_operand.vmem [shape: bf16[32,32], index: 2, kind: input, shape index: {}]
  %s3 = inlined_call_operand.vmem [shape: f32[32,1], index: 3, kind: input, shape index: {}]
  %s4 = inlined_call_operand.vmem [shape: bf16[32,32], index: 4, kind: input, shape index: {}]
  %s5 = inlined_call_operand.vmem [shape: f32[32,1], index: 5, kind: input, shape index: {}]
  %s6 = inlined_call_operand.vmem [shape: bf16[80,32], index: 6, kind: input, shape index: {}]
  %s7 = inlined_call_operand.vmem [shape: f32[80,1], index: 7, kind: input, shape index: {}]
  %s8 = inlined_call_operand.vmem [shape: f32[2,2,3,128], index: 8, kind: output, shape index: {0}]
  %s9 = inlined_call_operand.hbm [shape: bf16[2,2,32,128], index: 9, kind: output, shape index: {1}]
  %10 = xla_tuple %s8, %s9
  %s11 = sld [smem:[#allocation0]]
  $region73: #{tpu_custom_call.1} parent=0
    _
  %s13 = ssub.s32 1, %s11
  %s14 = scalar_select 0, %s13, %s11
  $region1: #{tpu_custom_call.1} parent=0
    #allocation2 [shape = 'u8[32768]{0}', space=vmem, size = 0x8000, scoped, tag = 'output window, operand 1']
    #allocation3 [shape = 's32[2]{0}', space=sflag, size = 0x8, scoped, tag = 'scoped memory for tpu_custom_call.1']
    %15 = vsyncpa [#allocation3], 0
    %s16 = scalar_lea.sflag [#allocation3], 1
    %17 = vsyncpa %s16, 0
    loop: start=0, step=1, limit=4
    $region2: #{tpu_custom_call.1} parent=1 // loop_pre_header
      _
    $region3: #{tpu_custom_call.1} parent=1 // loop_header
      %s19 = sphi 0, %s23
      %p20 = scmp.ge.s32.totalorder %s19, 4
      %s26 = sphi 0, %s38
      %s27 = sphi 0, %s34
      %s28 = sphi 0, %s26
      %s29 = sphi 0, %s27
      %s30 = sphi 0, %s28
      %s31 = sphi 0, %s29
      %s43 = sphi 0, %s45
      %s46 = sphi 0, %s43
      %s47 = sphi 0, %s46
      %s63 = sphi 0, %s47
      %s71 = sphi 0, %s73
      %s74 = sphi 0, %s71
      %s75 = sphi 0, %s74
      %s91 = sphi 0, %s75
      %s95 = sphi 0, %s95
      %s97 = sphi 0, %s95
      %s98 = sphi 0, %s97
      %s112 = sphi 0, %s98
      %s116 = sphi 0, %s116
      %s118 = sphi 0, %s116
      %s119 = sphi 0, %s118
      %s133 = sphi 0, %s119
      %s137 = sphi 0, %s137
      %s139 = sphi 0, %s137
      %s140 = sphi 0, %s139
      %s154 = sphi 0, %s140
      %s158 = sphi 0, %s158
      %s160 = sphi 0, %s158
      %s161 = sphi 0, %s160
      %s175 = sphi 0, %s161
      %s179 = sphi 0, %s179
      %s181 = sphi 0, %s179
      %s182 = sphi 0, %s181
      %s196 = sphi 0, %s182
      %s200 = sphi 0, %s200
      %s202 = sphi 0, %s200
      %s203 = sphi 0, %s202
      %s217 = sphi 0, %s203
      %s225 = sphi 0, %s227
      %s228 = sphi 0, %s225
      %s229 = sphi 0, %s228
      %s245 = sphi 0, %s229
      %s253 = sphi 0, %s255
      %s256 = sphi 0, %s253
      %s257 = sphi 0, %s256
      %s273 = sphi 0, %s257
    $region4: #{tpu_custom_call.1} parent=1 // loop_header_branch
      %22 = sbr.rel (%p20) target = $region8
    $region5: #{tpu_custom_call.1} parent=1 // loop_body
      %s24 = ssub.s32 %s19, 1
      %s25 = ssub.s32 %s19, 2
      %s32 = sadd.s32 1, %s27
      %p33 = scmp.ge.s32.totalorder %s32, 1
      %s34 = scalar_select %p33, 0, %s32
      %s35 = sadd.s32 1, %s26
      %s36 = scalar_select %p33, %s35, %s26
      %p37 = scmp.ge.s32.totalorder %s36, 2
      %s38 = scalar_select %p37, 0, %s36
      %s39 = ssub.s32 %s26, %s38
      %s40 = ssub.s32 %s27, %s34
      %s41 = sor.u32 %s39, %s40
      %p42 = scmp.eq.s32.totalorder %s41, 0
      %s44 = sadd.s32 %s43, 1
      %s45 = scalar_select %p42, %s43, %s44
      %p48 = pneg %p42
      %p49 = scmp.eq.s32.totalorder %s19, 1
      %p50 = por %p48, %p49
      %p51 = scmp.ne.s32.totalorder %s43, %s46
      %p52 = scmp.eq.s32.totalorder %s19, 0
      %p53 = por %p51, %p52
      %p54 = scmp.ne.s32.totalorder %s43, %s46
      %p55 = scmp.eq.s32.totalorder %s24, 1
      %p56 = por %p54, %p55
      %p57 = scmp.ne.s32.totalorder %s46, %s47
      %p58 = scmp.eq.s32.totalorder %s24, 0
      %p59 = por %p57, %p58
      %p60 = scmp.ne.s32.totalorder %s46, %s47
      %p61 = scmp.eq.s32.totalorder %s25, 1
      %p62 = por %p60, %p61
      %p64 = scmp.ne.s32.totalorder %s47, %s63
      %p65 = scmp.eq.s32.totalorder %s25, 0
      %p66 = por %p64, %p65
      %s67 = ssub.s32 %s26, %s38
      %s68 = ssub.s32 %s27, %s34
      %s69 = sor.u32 %s67, %s68
      %p70 = scmp.eq.s32.totalorder %s69, 0
      %s72 = sadd.s32 %s71, 1
      %s73 = scalar_select %p70, %s71, %s72
      %p76 = pneg %p70
      %p77 = scmp.eq.s32.totalorder %s19, 1
      %p78 = por %p76, %p77
      %p79 = scmp.ne.s32.totalorder %s71, %s74
      %p80 = scmp.eq.s32.totalorder %s19, 0
      %p81 = por %p79, %p80
      %p82 = scmp.ne.s32.totalorder %s71, %s74
      %p83 = scmp.eq.s32.totalorder %s24, 1
      %p84 = por %p82, %p83
      %p85 = scmp.ne.s32.totalorder %s74, %s75
      %p86 = scmp.eq.s32.totalorder %s24, 0
      %p87 = por %p85, %p86
      %p88 = scmp.ne.s32.totalorder %s74, %s75
      %p89 = scmp.eq.s32.totalorder %s25, 1
      %p90 = por %p88, %p89
      %p92 = scmp.ne.s32.totalorder %s75, %s91
      %p93 = scmp.eq.s32.totalorder %s25, 0
      %p94 = por %p92, %p93
      %s96 = sadd.s32 %s95, 1
      %p99 = scmp.eq.s32.totalorder %s19, 1
      %p100 = scmp.ne.s32.totalorder %s95, %s97
      %p101 = scmp.eq.s32.totalorder %s19, 0
      %p102 = por %p100, %p101
      %p103 = scmp.ne.s32.totalorder %s95, %s97
      %p104 = scmp.eq.s32.totalorder %s24, 1
      %p105 = por %p103, %p104
      %p106 = scmp.ne.s32.totalorder %s97, %s98
      %p107 = scmp.eq.s32.totalorder %s24, 0
      %p108 = por %p106, %p107
      %p109 = scmp.ne.s32.totalorder %s97, %s98
      %p110 = scmp.eq.s32.totalorder %s25, 1
      %p111 = por %p109, %p110
      %p113 = scmp.ne.s32.totalorder %s98, %s112
      %p114 = scmp.eq.s32.totalorder %s25, 0
      %p115 = por %p113, %p114
      %s117 = sadd.s32 %s116, 1
      %p120 = scmp.eq.s32.totalorder %s19, 1
      %p121 = scmp.ne.s32.totalorder %s116, %s118
      %p122 = scmp.eq.s32.totalorder %s19, 0
      %p123 = por %p121, %p122
      %p124 = scmp.ne.s32.totalorder %s116, %s118
      %p125 = scmp.eq.s32.totalorder %s24, 1
      %p126 = por %p124, %p125
      %p127 = scmp.ne.s32.totalorder %s118, %s119
      %p128 = scmp.eq.s32.totalorder %s24, 0
      %p129 = por %p127, %p128
      %p130 = scmp.ne.s32.totalorder %s118, %s119
      %p131 = scmp.eq.s32.totalorder %s25, 1
      %p132 = por %p130, %p131
      %p134 = scmp.ne.s32.totalorder %s119, %s133
      %p135 = scmp.eq.s32.totalorder %s25, 0
      %p136 = por %p134, %p135
      %s138 = sadd.s32 %s137, 1
      %p141 = scmp.eq.s32.totalorder %s19, 1
      %p142 = scmp.ne.s32.totalorder %s137, %s139
      %p143 = scmp.eq.s32.totalorder %s19, 0
      %p144 = por %p142, %p143
      %p145 = scmp.ne.s32.totalorder %s137, %s139
      %p146 = scmp.eq.s32.totalorder %s24, 1
      %p147 = por %p145, %p146
      %p148 = scmp.ne.s32.totalorder %s139, %s140
      %p149 = scmp.eq.s32.totalorder %s24, 0
      %p150 = por %p148, %p149
      %p151 = scmp.ne.s32.totalorder %s139, %s140
      %p152 = scmp.eq.s32.totalorder %s25, 1
      %p153 = por %p151, %p152
      %p155 = scmp.ne.s32.totalorder %s140, %s154
      %p156 = scmp.eq.s32.totalorder %s25, 0
      %p157 = por %p155, %p156
      %s159 = sadd.s32 %s158, 1
      %p162 = scmp.eq.s32.totalorder %s19, 1
      %p163 = scmp.ne.s32.totalorder %s158, %s160
      %p164 = scmp.eq.s32.totalorder %s19, 0
      %p165 = por %p163, %p164
      %p166 = scmp.ne.s32.totalorder %s158, %s160
      %p167 = scmp.eq.s32.totalorder %s24, 1
      %p168 = por %p166, %p167
      %p169 = scmp.ne.s32.totalorder %s160, %s161
      %p170 = scmp.eq.s32.totalorder %s24, 0
      %p171 = por %p169, %p170
      %p172 = scmp.ne.s32.totalorder %s160, %s161
      %p173 = scmp.eq.s32.totalorder %s25, 1
      %p174 = por %p172, %p173
      %p176 = scmp.ne.s32.totalorder %s161, %s175
      %p177 = scmp.eq.s32.totalorder %s25, 0
      %p178 = por %p176, %p177
      %s180 = sadd.s32 %s179, 1
      %p183 = scmp.eq.s32.totalorder %s19, 1
      %p184 = scmp.ne.s32.totalorder %s179, %s181
      %p185 = scmp.eq.s32.totalorder %s19, 0
      %p186 = por %p184, %p185
      %p187 = scmp.ne.s32.totalorder %s179, %s181
      %p188 = scmp.eq.s32.totalorder %s24, 1
      %p189 = por %p187, %p188
      %p190 = scmp.ne.s32.totalorder %s181, %s182
      %p191 = scmp.eq.s32.totalorder %s24, 0
      %p192 = por %p190, %p191
      %p193 = scmp.ne.s32.totalorder %s181, %s182
      %p194 = scmp.eq.s32.totalorder %s25, 1
      %p195 = por %p193, %p194
      %p197 = scmp.ne.s32.totalorder %s182, %s196
      %p198 = scmp.eq.s32.totalorder %s25, 0
      %p199 = por %p197, %p198
      %s201 = sadd.s32 %s200, 1
      %p204 = scmp.eq.s32.totalorder %s19, 1
      %p205 = scmp.ne.s32.totalorder %s200, %s202
      %p206 = scmp.eq.s32.totalorder %s19, 0
      %p207 = por %p205, %p206
      %p208 = scmp.ne.s32.totalorder %s200, %s202
      %p209 = scmp.eq.s32.totalorder %s24, 1
      %p210 = por %p208, %p209
      %p211 = scmp.ne.s32.totalorder %s202, %s203
      %p212 = scmp.eq.s32.totalorder %s24, 0
      %p213 = por %p211, %p212
      %p214 = scmp.ne.s32.totalorder %s202, %s203
      %p215 = scmp.eq.s32.totalorder %s25, 1
      %p216 = por %p214, %p215
      %p218 = scmp.ne.s32.totalorder %s203, %s217
      %p219 = scmp.eq.s32.totalorder %s25, 0
      %p220 = por %p218, %p219
      %s221 = ssub.s32 %s26, %s38
      %s222 = ssub.s32 %s27, %s34
      %s223 = sor.u32 %s221, %s222
      %p224 = scmp.eq.s32.totalorder %s223, 0
      %s226 = sadd.s32 %s225, 1
      %s227 = scalar_select %p224, %s225, %s226
      %p230 = pneg %p224
      %p231 = scmp.eq.s32.totalorder %s19, 1
      %p232 = por %p230, %p231
      %p233 = scmp.ne.s32.totalorder %s225, %s228
      %p234 = scmp.eq.s32.totalorder %s19, 0
      %p235 = por %p233, %p234
      %p236 = scmp.ne.s32.totalorder %s225, %s228
      %p237 = scmp.eq.s32.totalorder %s24, 1
      %p238 = por %p236, %p237
      %p239 = scmp.ne.s32.totalorder %s228, %s229
      %p240 = scmp.eq.s32.totalorder %s24, 0
      %p241 = por %p239, %p240
      %p242 = scmp.ne.s32.totalorder %s228, %s229
      %p243 = scmp.eq.s32.totalorder %s25, 1
      %p244 = por %p242, %p243
      %p246 = scmp.ne.s32.totalorder %s229, %s245
      %p247 = scmp.eq.s32.totalorder %s25, 0
      %p248 = por %p246, %p247
      %s249 = ssub.s32 %s26, %s38
      %s250 = ssub.s32 %s27, %s34
      %s251 = sor.u32 %s249, %s250
      %p252 = scmp.eq.s32.totalorder %s251, 0
      %s254 = sadd.s32 %s253, 1
      %s255 = scalar_select %p252, %s253, %s254
      %p258 = pneg %p252
      %p259 = scmp.eq.s32.totalorder %s19, 1
      %p260 = por %p258, %p259
      %p261 = scmp.ne.s32.totalorder %s253, %s256
      %p262 = scmp.eq.s32.totalorder %s19, 0
      %p263 = por %p261, %p262
      %p264 = scmp.ne.s32.totalorder %s253, %s256
      %p265 = scmp.eq.s32.totalorder %s24, 1
      %p266 = por %p264, %p265
      %p267 = scmp.ne.s32.totalorder %s256, %s257
      %p268 = scmp.eq.s32.totalorder %s24, 0
      %p269 = por %p267, %p268
      %p270 = scmp.ne.s32.totalorder %s256, %s257
      %p271 = scmp.eq.s32.totalorder %s25, 1
      %p272 = por %p270, %p271
      %p274 = scmp.ne.s32.totalorder %s257, %s273
      %p275 = scmp.eq.s32.totalorder %s25, 0
      %p276 = por %p274, %p275
      %p277 = scmp.le.s32.totalorder 1, %s19
      %p278 = scmp.lt.s32.totalorder %s19, 3
      %p279 = pnand %p277, %p278
      %p280 = pneg %p279
      // Predicated region
      $region9: #{tpu_custom_call.1} parent=5 // pred_check
        _
      $region10: #{tpu_custom_call.1} parent=5 // pred_check_branch
        %282 = sbr.rel (%p279) target = $region12
      $region11: #{tpu_custom_call.1} parent=5 // pred_region
        %s283 = ssub.s32 %s19, 1
        // Predicated region
        $region13: #{tpu_custom_call.1} parent=11 // pred_check
          %p284 = pneg %p108
        $region14: #{tpu_custom_call.1} parent=11 // pred_check_branch
          %286 = sbr.rel (%p284) target = $region16
        $region15: #{tpu_custom_call.1} parent=11 // pred_region
          _
        $region16: #{tpu_custom_call.1} parent=11 // pred_fallthru
          _
        // Predicated region
        $region17: #{tpu_custom_call.1} parent=11 // pred_check
          %p287 = pneg %p129
        $region18: #{tpu_custom_call.1} parent=11 // pred_check_branch
          %289 = sbr.rel (%p287) target = $region20
        $region19: #{tpu_custom_call.1} parent=11 // pred_region
          _
        $region20: #{tpu_custom_call.1} parent=11 // pred_fallthru
          _
        // Predicated region
        $region21: #{tpu_custom_call.1} parent=11 // pred_check
          %p290 = pneg %p150
        $region22: #{tpu_custom_call.1} parent=11 // pred_check_branch
          %292 = sbr.rel (%p290) target = $region24
        $region23: #{tpu_custom_call.1} parent=11 // pred_region
          _
        $region24: #{tpu_custom_call.1} parent=11 // pred_fallthru
          _
        // Predicated region
        $region25: #{tpu_custom_call.1} parent=11 // pred_check
          %p293 = pneg %p171
        $region26: #{tpu_custom_call.1} parent=11 // pred_check_branch
          %295 = sbr.rel (%p293) target = $region28
        $region27: #{tpu_custom_call.1} parent=11 // pred_region
          _
        $region28: #{tpu_custom_call.1} parent=11 // pred_fallthru
          _
        // Predicated region
        $region29: #{tpu_custom_call.1} parent=11 // pred_check
          %p296 = pneg %p192
        $region30: #{tpu_custom_call.1} parent=11 // pred_check_branch
          %298 = sbr.rel (%p296) target = $region32
        $region31: #{tpu_custom_call.1} parent=11 // pred_region
          _
        $region32: #{tpu_custom_call.1} parent=11 // pred_fallthru
          _
        // Predicated region
        $region33: #{tpu_custom_call.1} parent=11 // pred_check
          %p299 = pneg %p213
        $region34: #{tpu_custom_call.1} parent=11 // pred_check_branch
          %301 = sbr.rel (%p299) target = $region36
        $region35: #{tpu_custom_call.1} parent=11 // pred_region
          _
        $region36: #{tpu_custom_call.1} parent=11 // pred_fallthru
          _
      $region12: #{tpu_custom_call.1} parent=5 // pred_fallthru
        _
      %p302 = scmp.lt.s32.totalorder %s19, 2
      // Predicated region
      $region37: #{tpu_custom_call.1} parent=5 // pred_check
        %p303 = pneg %p302
      $region38: #{tpu_custom_call.1} parent=5 // pred_check_branch
        %305 = sbr.rel (%p303) target = $region40
      $region39: #{tpu_custom_call.1} parent=5 // pred_region
        // Predicated region
        $region41: #{tpu_custom_call.1} parent=39 // pred_check
          %p306 = pneg %p53
        $region42: #{tpu_custom_call.1} parent=39 // pred_check_branch
          %308 = sbr.rel (%p306) target = $region44
        $region43: #{tpu_custom_call.1} parent=39 // pred_region
          %p309 = scmp.lt.s32.totalorder %s26, 1
          %s310 = scalar_select %p309, %s26, 1
          %p311 = scmp.lt.s32.totalorder %s27, 0
          %s312 = scalar_select %p311, %s27, 0
          %s313 = smul.addr %s310, 4
          %s314 = sadd.s32 %s312, %s313
          %s315 = smul.addr %s314, 8
          %s316 = scalar_lea.vmem %s0, %s315
        $region44: #{tpu_custom_call.1} parent=39 // pred_fallthru
          _
        // Predicated region
        $region45: #{tpu_custom_call.1} parent=39 // pred_check
          %p317 = pneg %p81
        $region46: #{tpu_custom_call.1} parent=39 // pred_check_branch
          %319 = sbr.rel (%p317) target = $region48
        $region47: #{tpu_custom_call.1} parent=39 // pred_region
          %p320 = scmp.lt.s32.totalorder %s26, 1
          %s321 = scalar_select %p320, %s26, 1
          %p322 = scmp.lt.s32.totalorder %s27, 0
          %s323 = scalar_select %p322, %s27, 0
          %s324 = sadd.s32 %s323, %s321
          %s325 = smul.addr %s324, 4
          %s326 = scalar_lea.vmem %s1, %s325
        $region48: #{tpu_custom_call.1} parent=39 // pred_fallthru
          _
      $region40: #{tpu_custom_call.1} parent=5 // pred_fallthru
        _
      %p327 = scmp.le.s32.totalorder 1, %s19
      %p328 = scmp.lt.s32.totalorder %s19, 3
      %p329 = pnand %p327, %p328
      %p330 = pneg %p329
      // Predicated region
      $region49: #{tpu_custom_call.1} parent=5 // pred_check
        _
      $region50: #{tpu_custom_call.1} parent=5 // pred_check_branch
        %332 = sbr.rel (%p329) target = $region52
      $region51: #{tpu_custom_call.1} parent=5 // pred_region
        %s333 = ssub.s32 %s19, 1
        %p334 = scmp.lt.s32.totalorder %s28, 1
        %s335 = scalar_select %p334, %s28, 1
        %p336 = scmp.lt.s32.totalorder %s29, 0
        %s337 = scalar_select %p336, %s29, 0
        %s338 = smul.addr %s335, 4
        %s339 = sadd.s32 %s337, %s338
        %s340 = smul.addr %s339, 8
        %s341 = scalar_lea.vmem %s0, %s340
        %p342 = pneg %p59
        %p343 = pneg %p56
        %p344 = scmp.lt.s32.totalorder %s28, 1
        %s345 = scalar_select %p344, %s28, 1
        %p346 = scmp.lt.s32.totalorder %s29, 0
        %s347 = scalar_select %p346, %s29, 0
        %s348 = sadd.s32 %s347, %s345
        %s349 = smul.addr %s348, 4
        %s350 = scalar_lea.vmem %s1, %s349
        %p351 = pneg %p87
        %p352 = pneg %p84
        %p353 = pneg %p108
        %p354 = pneg %p105
        %p355 = pneg %p129
        %p356 = pneg %p126
        %p357 = pneg %p150
        %p358 = pneg %p147
        %p359 = pneg %p171
        %p360 = pneg %p168
        %p361 = pneg %p192
        %p362 = pneg %p189
        %p363 = pneg %p213
        %p364 = pneg %p210
        %p365 = pneg %p241
        %p366 = pneg %p238
        %p367 = scmp.lt.s32.totalorder %s28, 1
        %s368 = scalar_select %p367, %s28, 1
        %p369 = scmp.lt.s32.totalorder %s29, 0
        %s370 = scalar_select %p369, %s29, 0
        %s371 = smul.addr %s368, 2
        %s372 = sadd.s32 %s370, %s371
        %s373 = smul.addr %s372, 4
        %s374 = scalar_lea.vmem %s8, %s373
        %p375 = pneg %p269
        %p376 = pneg %p266
        %s377 = sand.u32 %s256, 1
        %s378 = scalar_lea.sflag [#allocation3], %s377
        %s379 = sand.u32 %s256, 1
        %s380 = smul.addr %s379, 32
        %s381 = scalar_lea.vmem [#allocation2], %s380
        %p382 = scmp.lt.s32.totalorder %s28, 1
        %s383 = scalar_select %p382, %s28, 1
        %p384 = scmp.lt.s32.totalorder %s29, 0
        %s385 = scalar_select %p384, %s29, 0
        %s386 = smul.addr %s383, 4
        %s387 = sadd.s32 %s385, %s386
        %s388 = smul.addr %s387, 8
        %s389 = scalar_lea.vmem %s0, %s388
        %p390 = scmp.lt.s32.totalorder %s28, 1
        %s391 = scalar_select %p390, %s28, 1
        %p392 = scmp.lt.s32.totalorder %s29, 0
        %s393 = scalar_select %p392, %s29, 0
        %s394 = sadd.s32 %s393, %s391
        %s395 = smul.addr %s394, 4
        %s396 = scalar_lea.vmem %s1, %s395
        %p397 = scmp.lt.s32.totalorder %s28, 1
        %s398 = scalar_select %p397, %s28, 1
        %p399 = scmp.lt.s32.totalorder %s29, 0
        %s400 = scalar_select %p399, %s29, 0
        %s401 = smul.addr %s398, 2
        %s402 = sadd.s32 %s400, %s401
        %s403 = smul.addr %s402, 4
        %s404 = scalar_lea.vmem %s8, %s403
        %v406 = vld [vmem:[%s389] sm:$0xff]
        %v407 = vld [vmem:[%s389 + $0x8] sm:$0xff]
        %v408 = vld [vmem:[%s389 + $0x10] sm:$0xff]
        %v409 = vld [vmem:[%s389 + $0x18] sm:$0xff]
        %v410 = vpack.c.bf16 %v407, %v406
        %v411 = vpack.c.bf16 %v409, %v408
        %v412 = vld [vmem:[%s2] sm:$0xf]
        %v413 = vld [vmem:[%s2 + $0x4] sm:$0xf]
        %v414 = vld [vmem:[%s2 + $0x8] sm:$0xf]
        %v415 = vld [vmem:[%s2 + $0xc] sm:$0xf]
        %v416 = vld [vmem:[%s3] sm:$0xff]
        %v417 = vld [vmem:[%s3 + $0x8] sm:$0xff]
        %v418 = vld [vmem:[%s3 + $0x10] sm:$0xff]
        %v419 = vld [vmem:[%s3 + $0x18] sm:$0xff]
        %421 = vset.pattern.permute.xlu0 0
        %422 = vperm.xlu0 %421, %v416
        %v423 = vpop.permute.xlu0 %422
        %426 = vset.pattern.permute.xlu0 0
        %427 = vperm.xlu0 %426, %v417
        %v428 = vpop.permute.xlu0 %427
        %431 = vset.pattern.permute.xlu0 0
        %432 = vperm.xlu0 %431, %v418
        %v433 = vpop.permute.xlu0 %432
        %436 = vset.pattern.permute.xlu0 0
        %437 = vperm.xlu0 %436, %v419
        %v438 = vpop.permute.xlu0 %437
        %v444 = vunpack.c.l.b16 %v412
        %v445 = vunpack.c.l.b16 %v413
        %v446 = vunpack.c.l.b16 %v414
        %v447 = vunpack.c.l.b16 %v415
        %v448 = vpack.c.b16 %v445, %v444
        %v449 = vpack.c.b16 %v447, %v446
        %vm450 = vcmask 261120
        %v452 = vsel %vm450, %v448, 0
        %v455 = vsel %vm450, %v449, 0
        %457 = vmatprep.subr.bf16.mxu0 0
        %458 = vmatpush1.bf16.msra.mxu0 %v410
        %459 = vmatprep.subr.bf16.mxu0 0
        %460 = vmatpush1.bf16.msra.mxu0 %v411
        %461 = vmatprep.subr.bf16.mxu0 0
        %462 = vmatpush1.bf16.msra.mxu0 0
        %463 = vmatprep.subr.bf16.mxu0 0
        %464 = vmatpush1.bf16.msra.mxu0 0
        %465 = vmatprep.subr.bf16.mxu0 0
        %466 = vmatpush1.bf16.msra.mxu0 0
        %467 = vmatprep.subr.bf16.mxu0 0
        %468 = vmatpush1.bf16.msra.mxu0 0
        %469 = vmatprep.subr.bf16.mxu0 0
        %470 = vmatpush1.bf16.msra.mxu0 0
        %471 = vmatprep.subr.bf16.mxu0 0
        %472 = vmatpush1.bf16.msra.mxu0 0
        %473 = vmatprep.subr.bf16.mxu0 0
        %474 = vmatpush1.bf16.msra.mxu0 0
        %475 = vmatprep.subr.bf16.mxu0 0
        %476 = vmatpush1.bf16.msra.mxu0 0
        %477 = vmatprep.subr.bf16.mxu0 0
        %478 = vmatpush1.bf16.msra.mxu0 0
        %479 = vmatprep.subr.bf16.mxu0 0
        %480 = vmatpush1.bf16.msra.mxu0 0
        %481 = vmatprep.subr.bf16.mxu0 0
        %482 = vmatpush1.bf16.msra.mxu0 0
        %483 = vmatprep.subr.bf16.mxu0 0
        %484 = vmatpush1.bf16.msra.mxu0 0
        %485 = vmatprep.subr.bf16.mxu0 0
        %486 = vmatpush1.bf16.msra.mxu0 0
        %487 = vmatprep.subr.bf16.mxu0 0
        %488 = vmatpush1.bf16.msra.mxu0 0
        %489 = vmatprep.mubr.bf16.mxu0 0
        %490 = vmatmul.mubr.bf16.gmra.mrb[0].mxu0 %v452
        %v491 = vpop.f32.mrb[0].mxu0
        %v492 = vadd.f32 %v423, %v491
        %v493 = vpop.f32.mrb[0].mxu0
        %v494 = vpop.f32.mrb[0].mxu0
        %v495 = vadd.f32 %v428, %v494
        %v496 = vpop.f32.mrb[0].mxu0
        %497 = vmatprep.mubr.bf16.mxu0 0
        %498 = vmatmul.mubr.bf16.gmra.mrb[0].mxu0 %v455
        %v499 = vpop.f32.mrb[0].mxu0
        %v500 = vadd.f32 %v433, %v499
        %v501 = vpop.f32.mrb[0].mxu0
        %v502 = vpop.f32.mrb[0].mxu0
        %v503 = vadd.f32 %v438, %v502
        %v504 = vpop.f32.mrb[0].mxu0
        %505 = vdwg.mxu0
        %v506 = vmax.f32 %v492, 0.0
        %v507 = vmax.f32 %v495, 0.0
        %v508 = vmax.f32 %v500, 0.0
        %v509 = vmax.f32 %v503, 0.0
        %v510 = vld [vmem:[%s4] sm:$0xf]
        %v511 = vld [vmem:[%s4 + $0x4] sm:$0xf]
        %v512 = vld [vmem:[%s4 + $0x8] sm:$0xf]
        %v513 = vld [vmem:[%s4 + $0xc] sm:$0xf]
        %v514 = vpack.c.bf16 %v507, %v506
        %v515 = vpack.c.bf16 %v509, %v508
        %v516 = vld [vmem:[%s5] sm:$0xff]
        %v517 = vld [vmem:[%s5 + $0x8] sm:$0xff]
        %v518 = vld [vmem:[%s5 + $0x10] sm:$0xff]
        %v519 = vld [vmem:[%s5 + $0x18] sm:$0xff]
        %521 = vset.pattern.permute.xlu0 0
        %522 = vperm.xlu0 %521, %v516
        %v523 = vpop.permute.xlu0 %522
        %526 = vset.pattern.permute.xlu0 0
        %527 = vperm.xlu0 %526, %v517
        %v528 = vpop.permute.xlu0 %527
        %531 = vset.pattern.permute.xlu0 0
        %532 = vperm.xlu0 %531, %v518
        %v533 = vpop.permute.xlu0 %532
        %536 = vset.pattern.permute.xlu0 0
        %537 = vperm.xlu0 %536, %v519
        %v538 = vpop.permute.xlu0 %537
        %v544 = vunpack.c.l.b16 %v510
        %v545 = vunpack.c.l.b16 %v511
        %v546 = vunpack.c.l.b16 %v512
        %v547 = vunpack.c.l.b16 %v513
        %v548 = vpack.c.b16 %v545, %v544
        %v549 = vpack.c.b16 %v547, %v546
        %v551 = vsel %vm450, %v548, 0
        %v554 = vsel %vm450, %v549, 0
        %556 = vmatprep.subr.bf16.mxu0 0
        %557 = vmatpush1.bf16.msra.mxu0 %v514
        %558 = vmatprep.subr.bf16.mxu0 0
        %559 = vmatpush1.bf16.msra.mxu0 %v515
        %560 = vmatprep.subr.bf16.mxu0 0
        %561 = vmatpush1.bf16.msra.mxu0 0
        %562 = vmatprep.subr.bf16.mxu0 0
        %563 = vmatpush1.bf16.msra.mxu0 0
        %564 = vmatprep.subr.bf16.mxu0 0
        %565 = vmatpush1.bf16.msra.mxu0 0
        %566 = vmatprep.subr.bf16.mxu0 0
        %567 = vmatpush1.bf16.msra.mxu0 0
        %568 = vmatprep.subr.bf16.mxu0 0
        %569 = vmatpush1.bf16.msra.mxu0 0
        %570 = vmatprep.subr.bf16.mxu0 0
        %571 = vmatpush1.bf16.msra.mxu0 0
        %572 = vmatprep.subr.bf16.mxu0 0
        %573 = vmatpush1.bf16.msra.mxu0 0
        %574 = vmatprep.subr.bf16.mxu0 0
        %575 = vmatpush1.bf16.msra.mxu0 0
        %576 = vmatprep.subr.bf16.mxu0 0
        %577 = vmatpush1.bf16.msra.mxu0 0
        %578 = vmatprep.subr.bf16.mxu0 0
        %579 = vmatpush1.bf16.msra.mxu0 0
        %580 = vmatprep.subr.bf16.mxu0 0
        %581 = vmatpush1.bf16.msra.mxu0 0
        %582 = vmatprep.subr.bf16.mxu0 0
        %583 = vmatpush1.bf16.msra.mxu0 0
        %584 = vmatprep.subr.bf16.mxu0 0
        %585 = vmatpush1.bf16.msra.mxu0 0
        %586 = vmatprep.subr.bf16.mxu0 0
        %587 = vmatpush1.bf16.msra.mxu0 0
        %588 = vmatprep.mubr.bf16.mxu0 0
        %589 = vmatmul.mubr.bf16.gmra.mrb[0].mxu0 %v551
        %v590 = vpop.f32.mrb[0].mxu0
        %v591 = vadd.f32 %v523, %v590
        %v592 = vpop.f32.mrb[0].mxu0
        %v593 = vpop.f32.mrb[0].mxu0
        %v594 = vadd.f32 %v528, %v593
        %v595 = vpop.f32.mrb[0].mxu0
        %596 = vmatprep.mubr.bf16.mxu0 0
        %597 = vmatmul.mubr.bf16.gmra.mrb[0].mxu0 %v554
        %v598 = vpop.f32.mrb[0].mxu0
        %v599 = vadd.f32 %v533, %v598
        %v600 = vpop.f32.mrb[0].mxu0
        %v601 = vpop.f32.mrb[0].mxu0
        %v602 = vadd.f32 %v538, %v601
        %v603 = vpop.f32.mrb[0].mxu0
        %604 = vdwg.mxu0
        %v605 = vmax.f32 %v591, 0.0
        %v606 = vmax.f32 %v594, 0.0
        %v607 = vmax.f32 %v599, 0.0
        %v608 = vmax.f32 %v602, 0.0
        %v609 = vld [vmem:[%s6] sm:$0xf]
        %v610 = vld [vmem:[%s6 + $0x4] sm:$0xf]
        %v611 = vld [vmem:[%s6 + $0x8] sm:$0xf]
        %v612 = vld [vmem:[%s6 + $0xc] sm:$0xf]
        %v613 = vld [vmem:[%s6 + $0x10] sm:$0xf]
        %v614 = vld [vmem:[%s6 + $0x14] sm:$0xf]
        %v615 = vld [vmem:[%s6 + $0x18] sm:$0xf]
        %v616 = vld [vmem:[%s6 + $0x1c] sm:$0xf]
        %v617 = vld [vmem:[%s6 + $0x20] sm:$0xf]
        %v618 = vld [vmem:[%s6 + $0x24] sm:$0xf]
        %v619 = vpack.c.bf16 %v606, %v605
        %v620 = vpack.c.bf16 %v608, %v607
        %v621 = vld [vmem:[%s7] sm:$0xff]
        %v622 = vld [vmem:[%s7 + $0x8] sm:$0xff]
        %v623 = vld [vmem:[%s7 + $0x10] sm:$0xff]
        %v624 = vld [vmem:[%s7 + $0x18] sm:$0xff]
        %v625 = vld [vmem:[%s7 + $0x20] sm:$0xff]
        %v626 = vld [vmem:[%s7 + $0x28] sm:$0xff]
        %v627 = vld [vmem:[%s7 + $0x30] sm:$0xff]
        %v628 = vld [vmem:[%s7 + $0x38] sm:$0xff]
        %v629 = vld [vmem:[%s7 + $0x40] sm:$0xff]
        %v630 = vld [vmem:[%s7 + $0x48] sm:$0xff]
        %632 = vset.pattern.permute.xlu0 0
        %633 = vperm.xlu0 %632, %v621
        %v634 = vpop.permute.xlu0 %633
        %637 = vset.pattern.permute.xlu0 0
        %638 = vperm.xlu0 %637, %v622
        %v639 = vpop.permute.xlu0 %638
        %642 = vset.pattern.permute.xlu0 0
        %643 = vperm.xlu0 %642, %v623
        %v644 = vpop.permute.xlu0 %643
        %647 = vset.pattern.permute.xlu0 0
        %648 = vperm.xlu0 %647, %v624
        %v649 = vpop.permute.xlu0 %648
        %652 = vset.pattern.permute.xlu0 0
        %653 = vperm.xlu0 %652, %v625
        %v654 = vpop.permute.xlu0 %653
        %657 = vset.pattern.permute.xlu0 0
        %658 = vperm.xlu0 %657, %v626
        %v659 = vpop.permute.xlu0 %658
        %662 = vset.pattern.permute.xlu0 0
        %663 = vperm.xlu0 %662, %v627
        %v664 = vpop.permute.xlu0 %663
        %667 = vset.pattern.permute.xlu0 0
        %668 = vperm.xlu0 %667, %v628
        %v669 = vpop.permute.xlu0 %668
        %672 = vset.pattern.permute.xlu0 0
        %673 = vperm.xlu0 %672, %v629
        %v674 = vpop.permute.xlu0 %673
        %677 = vset.pattern.permute.xlu0 0
        %678 = vperm.xlu0 %677, %v630
        %v679 = vpop.permute.xlu0 %678
        %v691 = vunpack.c.l.b16 %v609
        %v692 = vunpack.c.l.b16 %v610
        %v693 = vunpack.c.l.b16 %v611
        %v694 = vunpack.c.l.b16 %v612
        %v695 = vunpack.c.l.b16 %v613
        %v696 = vunpack.c.l.b16 %v614
        %v697 = vunpack.c.l.b16 %v615
        %v698 = vunpack.c.l.b16 %v616
        %v699 = vunpack.c.l.b16 %v617
        %v700 = vunpack.c.l.b16 %v618
        %v701 = vpack.c.b16 %v692, %v691
        %v702 = vpack.c.b16 %v694, %v693
        %v703 = vpack.c.b16 %v696, %v695
        %v704 = vpack.c.b16 %v698, %v697
        %v705 = vpack.c.b16 %v700, %v699
        %v707 = vsel %vm450, %v701, 0
        %v710 = vsel %vm450, %v702, 0
        %v713 = vsel %vm450, %v703, 0
        %v716 = vsel %vm450, %v704, 0
        %v719 = vsel %vm450, %v705, 0
        %721 = vmatprep.subr.bf16.mxu0 0
        %722 = vmatpush1.bf16.msra.mxu0 %v619
        %723 = vmatprep.subr.bf16.mxu0 0
        %724 = vmatpush1.bf16.msra.mxu0 %v620
        %725 = vmatprep.subr.bf16.mxu0 0
        %726 = vmatpush1.bf16.msra.mxu0 0
        %727 = vmatprep.subr.bf16.mxu0 0
        %728 = vmatpush1.bf16.msra.mxu0 0
        %729 = vmatprep.subr.bf16.mxu0 0
        %730 = vmatpush1.bf16.msra.mxu0 0
        %731 = vmatprep.subr.bf16.mxu0 0
        %732 = vmatpush1.bf16.msra.mxu0 0
        %733 = vmatprep.subr.bf16.mxu0 0
        %734 = vmatpush1.bf16.msra.mxu0 0
        %735 = vmatprep.subr.bf16.mxu0 0
        %736 = vmatpush1.bf16.msra.mxu0 0
        %737 = vmatprep.subr.bf16.mxu0 0
        %738 = vmatpush1.bf16.msra.mxu0 0
        %739 = vmatprep.subr.bf16.mxu0 0
        %740 = vmatpush1.bf16.msra.mxu0 0
        %741 = vmatprep.subr.bf16.mxu0 0
        %742 = vmatpush1.bf16.msra.mxu0 0
        %743 = vmatprep.subr.bf16.mxu0 0
        %744 = vmatpush1.bf16.msra.mxu0 0
        %745 = vmatprep.subr.bf16.mxu0 0
        %746 = vmatpush1.bf16.msra.mxu0 0
        %747 = vmatprep.subr.bf16.mxu0 0
        %748 = vmatpush1.bf16.msra.mxu0 0
        %749 = vmatprep.subr.bf16.mxu0 0
        %750 = vmatpush1.bf16.msra.mxu0 0
        %751 = vmatprep.subr.bf16.mxu0 0
        %752 = vmatpush1.bf16.msra.mxu0 0
        %753 = vmatprep.mubr.bf16.mxu0 0
        %754 = vmatmul.mubr.bf16.gmra.mrb[0].mxu0 %v707
        %v755 = vpop.f32.mrb[0].mxu0
        %v756 = vadd.f32 %v634, %v755
        %v757 = vpop.f32.mrb[0].mxu0
        %v758 = vpop.f32.mrb[0].mxu0
        %v759 = vadd.f32 %v639, %v758
        %v760 = vpop.f32.mrb[0].mxu0
        %761 = vmatprep.mubr.bf16.mxu0 0
        %762 = vmatmul.mubr.bf16.gmra.mrb[0].mxu0 %v710
        %v763 = vpop.f32.mrb[0].mxu0
        %v764 = vadd.f32 %v644, %v763
        %v765 = vpop.f32.mrb[0].mxu0
        %v766 = vpop.f32.mrb[0].mxu0
        %v767 = vadd.f32 %v649, %v766
        %v768 = vpop.f32.mrb[0].mxu0
        %769 = vmatprep.mubr.bf16.mxu0 0
        %770 = vmatmul.mubr.bf16.gmra.mrb[0].mxu0 %v713
        %v771 = vpop.f32.mrb[0].mxu0
        %v772 = vadd.f32 %v654, %v771
        %v773 = vpop.f32.mrb[0].mxu0
        %v774 = vpop.f32.mrb[0].mxu0
        %v775 = vadd.f32 %v659, %v774
        %v776 = vpop.f32.mrb[0].mxu0
        %777 = vmatprep.mubr.bf16.mxu0 0
        %778 = vmatmul.mubr.bf16.gmra.mrb[0].mxu0 %v716
        %v779 = vpop.f32.mrb[0].mxu0
        %v780 = vadd.f32 %v664, %v779
        %v781 = vpop.f32.mrb[0].mxu0
        %v782 = vpop.f32.mrb[0].mxu0
        %v783 = vadd.f32 %v669, %v782
        %v784 = vpop.f32.mrb[0].mxu0
        %785 = vmatprep.mubr.bf16.mxu0 0
        %786 = vmatmul.mubr.bf16.gmra.mrb[0].mxu0 %v719
        %v787 = vpop.f32.mrb[0].mxu0
        %v788 = vadd.f32 %v674, %v787
        %v789 = vpop.f32.mrb[0].mxu0
        %v790 = vpop.f32.mrb[0].mxu0
        %v791 = vadd.f32 %v679, %v790
        %v792 = vpop.f32.mrb[0].mxu0
        %793 = vdwg.mxu0
        %v794 = vld [vmem:[%s396] sm:$0x7]
        %v795 = vadd.f32 %v406, %v756
        %v796 = vadd.f32 %v407, %v759
        %v797 = vadd.f32 %v408, %v764
        %v798 = vadd.f32 %v409, %v767
        %v799 = vpack.c.bf16 %v796, %v795
        %v800 = vpack.c.bf16 %v798, %v797
        %v803 = vunpack.c.l.b16 %v799
        %v804 = vunpack.c.h.b16 %v799
        %v805 = vunpack.c.l.b16 %v800
        %v806 = vunpack.c.h.b16 %v800
        %v807 = vpack.c.b16 %v803, %v803
        %v808 = vpack.c.b16 %v804, %v804
        %v809 = vpack.c.b16 %v805, %v805
        %v810 = vpack.c.b16 %v806, %v806
        %815 = vst [vmem:[%s381] sm:$0xf] %v807
        %816 = vst [vmem:[%s381 + $0x4] sm:$0xf] %v808
        %817 = vst [vmem:[%s381 + $0x8] sm:$0xf] %v809
        %818 = vst [vmem:[%s381 + $0xc] sm:$0xf] %v810
        %v819 = vadd.f32 %v794, %v788
        %820 = vst [vmem:[%s404] sm:$0x7] %v819
        %v821 = vadd.f32 %v406, %v772
        %v822 = vadd.f32 %v407, %v775
        %v823 = vadd.f32 %v408, %v780
        %v824 = vadd.f32 %v409, %v783
        %v825 = vpack.c.bf16 %v822, %v821
        %v826 = vpack.c.bf16 %v824, %v823
        %v829 = vunpack.c.l.b16 %v825
        %v830 = vunpack.c.h.b16 %v825
        %v831 = vunpack.c.l.b16 %v826
        %v832 = vunpack.c.h.b16 %v826
        %v833 = vpack.c.b16 %v829, %v829
        %v834 = vpack.c.b16 %v830, %v830
        %v835 = vpack.c.b16 %v831, %v831
        %v836 = vpack.c.b16 %v832, %v832
        %s841 = scalar_lea.vmem %s381, 16 [#allocation2]
        %842 = vst [vmem:[%s841] sm:$0xf] %v833
        %843 = vst [vmem:[%s841 + $0x4] sm:$0xf] %v834
        %844 = vst [vmem:[%s841 + $0x8] sm:$0xf] %v835
        %845 = vst [vmem:[%s841 + $0xc] sm:$0xf] %v836
        %v846 = vadd.f32 %v794, %v791
        %s847 = scalar_lea.vmem %s404, 4
        %848 = vst [vmem:[%s847] sm:$0x7] %v846
        %p849 = scmp.lt.s32.totalorder %s28, 1
        %s850 = scalar_select %p849, %s28, 1
        %p851 = scmp.lt.s32.totalorder %s29, 0
        %s852 = scalar_select %p851, %s29, 0
        %s853 = smul.addr %s850, 2
        %s854 = sadd.s32 %s852, %s853
        %s855 = smul.addr %s854, 4
        %s856 = scalar_lea.vmem %s8, %s855
        %s857 = sand.u32 %s256, 1
        %s858 = scalar_lea.sflag [#allocation3], %s857
        %s859 = sand.u32 %s256, 1
        %s860 = smul.addr %s859, 32
        %s861 = scalar_lea.vmem [#allocation2], %s860
        // Predicated region
        $region53: #{tpu_custom_call.1} parent=51 // pred_check
          %p862 = pneg %p238
        $region54: #{tpu_custom_call.1} parent=51 // pred_check_branch
          %864 = sbr.rel (%p862) target = $region56
        $region55: #{tpu_custom_call.1} parent=51 // pred_region
          _
        $region56: #{tpu_custom_call.1} parent=51 // pred_fallthru
          _
        // Predicated region
        $region57: #{tpu_custom_call.1} parent=51 // pred_check
          %p865 = pneg %p266
        $region58: #{tpu_custom_call.1} parent=51 // pred_check_branch
          %867 = sbr.rel (%p865) target = $region60
        $region59: #{tpu_custom_call.1} parent=51 // pred_region
          %s869 = ssub.s32 512, 512
          %870 = vsyncadd %s858, %s869
          %s871 = smul.addr %s28, 8
          %s872 = sadd.s32 %s29, %s871
          %s873 = smul.addr %s872, 64
          %s874 = scalar_lea.hbm %s9, %s873
          %s875 = sshll.u32 %s861, 4
          %s876 = int_to_ptr.vmem [resolvable:$true] %s875
          %881 = dma.vmem_to_hbm [thread:$0]  %s876, 512, %s874, %s858, 64, 64, 4
        $region60: #{tpu_custom_call.1} parent=51 // pred_fallthru
          _
      $region52: #{tpu_custom_call.1} parent=5 // pred_fallthru
        _
      %p882 = scmp.le.s32.totalorder 2, %s19
      // Predicated region
      $region61: #{tpu_custom_call.1} parent=5 // pred_check
        %p883 = pneg %p882
      $region62: #{tpu_custom_call.1} parent=5 // pred_check_branch
        %885 = sbr.rel (%p883) target = $region64
      $region63: #{tpu_custom_call.1} parent=5 // pred_region
        %s886 = ssub.s32 %s19, 2
        // Predicated region
        $region65: #{tpu_custom_call.1} parent=63 // pred_check
          %p887 = pneg %p244
        $region66: #{tpu_custom_call.1} parent=63 // pred_check_branch
          %889 = sbr.rel (%p887) target = $region68
        $region67: #{tpu_custom_call.1} parent=63 // pred_region
          %p890 = scmp.lt.s32.totalorder %s30, 1
          %s891 = scalar_select %p890, %s30, 1
          %p892 = scmp.lt.s32.totalorder %s31, 0
          %s893 = scalar_select %p892, %s31, 0
          %s894 = smul.addr %s891, 2
          %s895 = sadd.s32 %s893, %s894
          %s896 = smul.addr %s895, 4
          %s897 = scalar_lea.vmem %s8, %s896
        $region68: #{tpu_custom_call.1} parent=63 // pred_fallthru
          _
        // Predicated region
        $region69: #{tpu_custom_call.1} parent=63 // pred_check
          %p898 = pneg %p272
        $region70: #{tpu_custom_call.1} parent=63 // pred_check_branch
          %900 = sbr.rel (%p898) target = $region72
        $region71: #{tpu_custom_call.1} parent=63 // pred_region
          %s901 = sand.u32 %s257, 1
          %s902 = scalar_lea.sflag [#allocation3], %s901
          %s903 = sand.u32 %s257, 1
          %s904 = smul.addr %s903, 32
          %s905 = scalar_lea.vmem [#allocation2], %s904
          %906 = dma.done %s902, 512
        $region72: #{tpu_custom_call.1} parent=63 // pred_fallthru
          _
      $region64: #{tpu_custom_call.1} parent=5 // pred_fallthru
        _
    $region6: #{tpu_custom_call.1} parent=1 // loop_footer
      %s23 = sadd.s32 1, %s19
    $region7: #{tpu_custom_call.1} parent=1 // loop_footer_branch
      %18 = sbr.rel target = $region3
    $region8: #{tpu_custom_call.1} parent=1 // loop_exit
      _
    %907 = vsyncpa [#allocation3], 1
    %s908 = scalar_lea.sflag [#allocation3], 1
    %909 = vsyncpa %s908, 1

</llo_original>
